<compile_context>
chip_gen: v7x
topology: tpu7x:2x2x1
jax: 0.10.0
libtpu: 0.0.40
codegen_flags: <defaults>
</compile_context>

<pallas_src>
import jax
import jax.numpy as jnp
import numpy as np
from jax.experimental import pallas as pl
from jax.experimental.pallas import tpu as pltpu

# --- config mirroring arguments(): S=7 grid, B=2 boxes, C=1 class ------------
S = 7
B = 2
C = 1
D = C + 5 * B            # 11 channels per cell
PRED_CH = 5 * B          # 10 prediction channels the kernel needs (conf1, box1, conf2, box2)
TGT_CH = 5               # target channels the kernel needs (objectness + box)
LAMBDA_COORD = 5.0
# lambda_noobj / class loss are declared in __init__ but unused in forward().

MAX_TILE_ROWS = 16 * 1024   # rows per grid step; multiple of 1024 so the
                            # (rows // 128) block dim is a multiple of 8.
                            # Per-step footprint (pred+tgt+out, double-buffered)
                            # is ~3.5 MiB -> fine on v5e/v6e/v7x VMEM.


def _round_up(x, m):
    return (x + m - 1) // m * m


def _cdiv(a, b):
    return -(-a // b)


def _choose_tiling(r):
    """Returns (tile_rows, num_tiles) for r rows of grid cells."""
    r128 = _round_up(max(r, 1), 128)
    if r128 <= 1024:
        # Small problem: a single grid step whose block spans the whole
        # (padded) row axis (block dim == full dim, so no (8,128) issue).
        return r128, 1
    # Large problem: tiles are multiples of 1024 rows, capped at MAX_TILE_ROWS,
    # and we keep >= 2 grid steps so the "parallel" grid axis can shard across
    # v7x's two TensorCores (and the pipeline has something to overlap).
    num_tiles = max(2, _cdiv(r128, MAX_TILE_ROWS))
    tile = min(MAX_TILE_ROWS, _round_up(_cdiv(r128, num_tiles), 1024))
    num_tiles = _cdiv(r128, tile)
    return tile, num_tiles


def _yolo_loss_kernel(pred_ref, tgt_ref, partial_ref, bp_ref):
    """Blocks are (channels, row_blocks, 128): channels on the leading axis,
    rows split into fully packed (row_blocks, 128) vreg slabs.

    pred_ref:    (10, RB, 128) -- conf1, box1(x,y,w,h), conf2, box2(x,y,w,h)
    tgt_ref:     (5,  RB, 128) -- objectness, box(x,y,w,h)
    partial_ref: (2, 128)      -- lane-wise partial sums (row 0 box, row 1 obj)
    bp_ref:      (4, RB, 128)  -- box_predictions (exists * selected box)
    """
    pred = pred_ref[...].astype(jnp.float32)
    tgt = tgt_ref[...].astype(jnp.float32)

    exists = tgt[0]                                  # (RB, 128)
    tx, ty, tw, th = tgt[1], tgt[2], tgt[3], tgt[4]

    # ---- target box corners / area: hoisted once, shared by both IoUs ------
    t_x1 = tx - 0.5 * tw
    t_x2 = tx + 0.5 * tw
    t_y1 = ty - 0.5 * th
    t_y2 = ty + 0.5 * th
    t_area = jnp.abs((t_x2 - t_x1) * (t_y2 - t_y1))

    def inter_area(px, py, pw, ph):
        p_x1 = px - 0.5 * pw
        p_x2 = px + 0.5 * pw
        p_y1 = py - 0.5 * ph
        p_y2 = py + 0.5 * ph
        ix = jnp.maximum(jnp.minimum(p_x2, t_x2) - jnp.maximum(p_x1, t_x1), 0.0)
        iy = jnp.maximum(jnp.minimum(p_y2, t_y2) - jnp.maximum(p_y1, t_y1), 0.0)
        return ix * iy, jnp.abs((p_x2 - p_x1) * (p_y2 - p_y1))

    i1, a1 = inter_area(pred[1], pred[2], pred[3], pred[4])
    i2, a2 = inter_area(pred[6], pred[7], pred[8], pred[9])

    den1 = a1 + t_area - i1 + 1e-6          # > 0
    den2 = a2 + t_area - i2 + 1e-6          # > 0
    # Division-free bestbox: iou2 > iou1  <=>  i2*den1 > i1*den2.
    # (torch.max on ties returns the first index -> box 1, i.e. best2 = 0.
    #  Under f32 rounding near-exact ties could flip vs. the division-based
    #  reference; measure-zero for real data.)
    best2 = (i2 * den1 > i1 * den2).astype(jnp.float32)   # (RB, 128)
    best1 = 1.0 - best2

    e = exists[None]                                       # (1, RB, 128)
    box_pred = e * (best2[None] * pred[6:10] + best1[None] * pred[1:5])
    box_tgt = e * tgt[1:5]

    dd = jnp.square(box_pred - box_tgt)                    # (4, RB, 128)
    box_rows = dd[0] + dd[1] + dd[2] + dd[3]               # (RB, 128) VPU adds

    # object loss: exists*pred_conf vs exists*target_objectness (channel 0).
    # TODO(synk): the torch forward reassigns `target = box_targets` before its
    # object_loss line, so literally it compares against box_targets[..., 1:2]
    # (the target y-coordinate); we keep the conventional objectness target,
    # matching the previously accepted kernel / reference.
    pred_conf = best2 * pred[5] + best1 * pred[0]
    od = exists * (pred_conf - exists)
    obj_rows = od * od                                     # (RB, 128)

    # Lane-wise partial sums: reduce only over the sublane/row-block axis;
    # the wrapper does the final 128-lane sum.
    partial_ref[0:1, :] = jnp.sum(box_rows, axis=0, keepdims=True)
    partial_ref[1:2, :] = jnp.sum(obj_rows, axis=0, keepdims=True)

    # Lane-dense per-row output: only box_pred needs to leave the kernel.
    bp_ref[...] = box_pred


@jax.jit
def yolo_loss(predictions, target):
    """predictions: (N, S*S*D) flat head output; target: (N, S, S, D)."""
    n = target.shape[0]
    r = n * S * S
    tile, num_tiles = _choose_tiling(r)
    r_pad = tile * num_tiles
    tb = tile // 128

    # Only the channels the kernel needs are transposed / DMA'd:
    #   predictions: conf1, box1, conf2, box2   (10 of 11 channels)
    #   target:      objectness + box           (5 of 11 channels)
    # Channels on the leading axis, rows re-laid as (row_blocks, 128) so every
    # per-channel slice fills whole (8,128) vregs. Zero-padded rows have
    # exists=0 and den=1e-6>0, so they contribute exactly 0 to both losses.
    pred2d = predictions.reshape(r, D)[:, C:C + PRED_CH]
    tgt2d = target.reshape(r, D)[:, C:C + TGT_CH]
    pred_t = jnp.pad(pred2d.T, ((0, 0), (0, r_pad - r))).reshape(
        PRED_CH, r_pad // 128, 128)
    tgt_t = jnp.pad(tgt2d.T, ((0, 0), (0, r_pad - r))).reshape(
        TGT_CH, r_pad // 128, 128)
    # TODO(synk): these transposes are one extra HBM pass over the (sliced)
    # inputs; if the detection head can emit channels-first (D, rows) directly
    # they disappear entirely.

    partial, bp_slab = pl.pallas_call(
        _yolo_loss_kernel,
        out_shape=(
            jax.ShapeDtypeStruct((2, num_tiles * 128), jnp.float32),   # lane partials
            jax.ShapeDtypeStruct((4, r_pad // 128, 128), jnp.float32),  # box_pred
        ),
        grid=(num_tiles,),
        in_specs=[pl.BlockSpec((PRED_CH, tb, 128), lambda i: (0, i, 0)),
                  pl.BlockSpec((TGT_CH, tb, 128), lambda i: (0, i, 0))],
        out_specs=(pl.BlockSpec((2, 128), lambda i: (0, i)),
                   pl.BlockSpec((4, tb, 128), lambda i: (0, i, 0))),
        compiler_params=pltpu.CompilerParams(
            dimension_semantics=("parallel",)),
    )(pred_t, tgt_t)

    # Final reduction of the per-tile, per-lane partial sums.
    box_loss = jnp.sum(partial[0])
    obj_loss = jnp.sum(partial[1])
    loss = LAMBDA_COORD * box_loss + obj_loss

    # Cheap, fusable epilogue in natural row-major layout (kept out of the
    # kernel so the kernel writes 4 rows/cell instead of 10).
    box_pred = bp_slab.reshape(4, r_pad)[:, :r].T.reshape(n, S, S, 4)
    tgt4 = target.astype(jnp.float32)
    box_target = tgt4[..., C:C + 1] * tgt4[..., C + 1:C + 5]
    # Mirrors the torch expression exactly (treats the (w,h) slice as a second
    # corner, so this is not a true box center).
    central_point = box_pred[..., 0:2] + (box_pred[..., 2:4] - box_pred[..., 0:2]) * 0.5

    loss_dict = {'box_loss': box_loss, 'object_loss': obj_loss, 'loss': loss}
    log_data = {'box_target': box_target, 'box_pred': box_pred,
                'central_point': central_point}
    return loss_dict, log_data


# --- pure-JAX reference (mirrors the torch forward, incl. division) ----------
def _iou_midpoint(bp, bl):
    b1x1 = bp[:, 0:1] - bp[:, 2:3] / 2
    b1y1 = bp[:, 1:2] - bp[:, 3:4] / 2
    b1x2 = bp[:, 0:1] + bp[:, 2:3] / 2
    b1y2 = bp[:, 1:2] + bp[:, 3:4] / 2
    b2x1 = bl[:, 0:1] - bl[:, 2:3] / 2
    b2y1 = bl[:, 1:2] - bl[:, 3:4] / 2
    b2x2 = bl[:, 0:1] + bl[:, 2:3] / 2
    b2y2 = bl[:, 1:2] + bl[:, 3:4] / 2
    x1 = jnp.maximum(b1x1, b2x1)
    y1 = jnp.maximum(b1y1, b2y1)
    x2 = jnp.minimum(b1x2, b2x2)
    y2 = jnp.minimum(b1y2, b2y2)
    inter = jnp.maximum(x2 - x1, 0.0) * jnp.maximum(y2 - y1, 0.0)
    a1 = jnp.abs((b1x2 - b1x1) * (b1y2 - b1y1))
    a2 = jnp.abs((b2x2 - b2x1) * (b2y2 - b2y1))
    return inter / (a1 + a2 - inter + 1e-6)


def _reference(predictions, target):
    n = target.shape[0]
    pred = predictions.reshape(n * S * S, D).astype(jnp.float32)
    tgt = target.reshape(n * S * S, D).astype(jnp.float32)
    pb1, pb2, tb_ = pred[:, C + 1:C + 5], pred[:, C + 6:C + 10], tgt[:, C + 1:C + 5]
    iou1, iou2 = _iou_midpoint(pb1, tb_), _iou_midpoint(pb2, tb_)
    bestbox = (iou2 > iou1).astype(jnp.float32)
    exists = tgt[:, C:C + 1]
    box_pred = exists * (bestbox * pb2 + (1 - bestbox) * pb1)
    box_tgt = exists * tb_
    box_loss = jnp.sum((box_pred - box_tgt) ** 2)
    pred_conf = bestbox * pred[:, C + 5:C + 6] + (1 - bestbox) * pred[:, C:C + 1]
    obj_loss = jnp.sum((exists * pred_conf - exists * tgt[:, C:C + 1]) ** 2)
    cp = box_pred[:, 0:2] + (box_pred[:, 2:4] - box_pred[:, 0:2]) * 0.5
    return {'box_loss': box_loss, 'object_loss': obj_loss,
            'loss': LAMBDA_COORD * box_loss + obj_loss,
            'box_pred': box_pred.reshape(n, S, S, 4),
            'box_target': box_tgt.reshape(n, S, S, 4),
            'central_point': cp.reshape(n, S, S, 2)}


if __name__ == "__main__":
    def make_inputs(key, n):
        k1, k2, k3, k4 = jax.random.split(key, 4)
        predictions = jax.random.normal(k1, (n, S * S * D), dtype=jnp.float32)
        exists = (jax.random.uniform(k2, (n, S, S)) > 0.5).astype(jnp.float32)
        boxes = jax.random.uniform(k3, (n, S, S, 4), minval=0.05, maxval=0.95)
        cls = jax.random.uniform(k4, (n, S, S, C))
        target = jnp.zeros((n, S, S, D), dtype=jnp.float32)
        target = target.at[..., :C].set(cls)
        target = target.at[..., C].set(exists)
        target = target.at[..., C + 1:C + 5].set(boxes)
        return predictions, target

    def check(n, key):
        predictions, target = make_inputs(key, n)
        loss_dict, log_data = yolo_loss(predictions, target)
        jax.block_until_ready(loss_dict['loss'])
        ref = _reference(predictions, target)
        np.testing.assert_allclose(np.asarray(loss_dict['box_loss']),
                                   np.asarray(ref['box_loss']), rtol=1e-5, atol=1e-4)
        np.testing.assert_allclose(np.asarray(loss_dict['object_loss']),
                                   np.asarray(ref['object_loss']), rtol=1e-5, atol=1e-4)
        np.testing.assert_allclose(np.asarray(loss_dict['loss']),
                                   np.asarray(ref['loss']), rtol=1e-5, atol=1e-4)
        np.testing.assert_allclose(np.asarray(log_data['box_pred']),
                                   np.asarray(ref['box_pred']), rtol=1e-5, atol=1e-5)
        np.testing.assert_allclose(np.asarray(log_data['box_target']),
                                   np.asarray(ref['box_target']), rtol=1e-5, atol=1e-5)
        np.testing.assert_allclose(np.asarray(log_data['central_point']),
                                   np.asarray(ref['central_point']), rtol=1e-5, atol=1e-5)
        assert log_data['box_pred'].shape == (n, S, S, 4)
        assert log_data['box_target'].shape == (n, S, S, 4)
        assert log_data['central_point'].shape == (n, S, S, 2)

    # TODO(synk): the torch module's try/except + pdb.set_trace() and the
    # stateful self.box_loss/... attribute bookkeeping are host-side debugging
    # with no kernel equivalent; .detach() is a no-op in this forward pass.
    key = jax.random.PRNGKey(0)
    k_small, k_big = jax.random.split(key)
    check(2, k_small)    # single-tile path (98 rows -> one 128-lane block)
    check(24, k_big)     # multi-tile path (1176 rows -> 2 grid steps of 1024 rows)
    print("KERNEL_OK")
</pallas_src>

<mosaic_0001>
module attributes {stable_mosaic.version = 11 : i64} {
  func.func @_yolo_loss_kernel(%arg0: i32, %arg1: memref<10x1x128xf32, #tpu.memory_space<vmem>>, %arg2: memref<5x1x128xf32, #tpu.memory_space<vmem>>, %arg3: memref<2x128xf32, #tpu.memory_space<vmem>>, %arg4: memref<4x1x128xf32, #tpu.memory_space<vmem>>) attributes {dimension_semantics = [#tpu.dimension_semantics<parallel>], iteration_bounds = array<i64: 1>, scalar_prefetch = 0 : i64, scratch_operands = 0 : i64, tpu.core_type = #tpu.core_type<tc>, window_params = [{transform_indices = @transform_0, window_bounds = array<i64: 10, 1, 128>}, {transform_indices = @transform_1, window_bounds = array<i64: 5, 1, 128>}, {transform_indices = @transform_2, window_bounds = array<i64: 2, 128>}, {transform_indices = @transform_3, window_bounds = array<i64: 4, 1, 128>}]} {
    %c0 = arith.constant 0 : index
    %c0_0 = arith.constant 0 : index
    %c0_1 = arith.constant 0 : index
    %0 = vector.load %arg1[%c0, %c0_0, %c0_1] : memref<10x1x128xf32, #tpu.memory_space<vmem>>, vector<10x1x128xf32>
    %c0_2 = arith.constant 0 : index
    %c0_3 = arith.constant 0 : index
    %c0_4 = arith.constant 0 : index
    %1 = vector.load %arg2[%c0_2, %c0_3, %c0_4] : memref<5x1x128xf32, #tpu.memory_space<vmem>>, vector<5x1x128xf32>
    %2 = vector.extract_strided_slice %1 {offsets = [0, 0, 0], sizes = [1, 1, 128], strides = [1, 1, 1]} : vector<5x1x128xf32> to vector<1x1x128xf32>
    %3 = vector.shape_cast %2 : vector<1x1x128xf32> to vector<1x128xf32>
    %4 = vector.extract_strided_slice %1 {offsets = [1, 0, 0], sizes = [1, 1, 128], strides = [1, 1, 1]} : vector<5x1x128xf32> to vector<1x1x128xf32>
    %5 = vector.shape_cast %4 : vector<1x1x128xf32> to vector<1x128xf32>
    %6 = vector.extract_strided_slice %1 {offsets = [2, 0, 0], sizes = [1, 1, 128], strides = [1, 1, 1]} : vector<5x1x128xf32> to vector<1x1x128xf32>
    %7 = vector.shape_cast %6 : vector<1x1x128xf32> to vector<1x128xf32>
    %8 = vector.extract_strided_slice %1 {offsets = [3, 0, 0], sizes = [1, 1, 128], strides = [1, 1, 1]} : vector<5x1x128xf32> to vector<1x1x128xf32>
    %9 = vector.shape_cast %8 : vector<1x1x128xf32> to vector<1x128xf32>
    %10 = vector.extract_strided_slice %1 {offsets = [4, 0, 0], sizes = [1, 1, 128], strides = [1, 1, 1]} : vector<5x1x128xf32> to vector<1x1x128xf32>
    %11 = vector.shape_cast %10 : vector<1x1x128xf32> to vector<1x128xf32>
    %cst = arith.constant 5.000000e-01 : f32
    %12 = vector.broadcast %cst : f32 to vector<1x128xf32>
    %13 = arith.mulf %12, %9 : vector<1x128xf32>
    %14 = arith.subf %5, %13 : vector<1x128xf32>
    %cst_5 = arith.constant 5.000000e-01 : f32
    %15 = vector.broadcast %cst_5 : f32 to vector<1x128xf32>
    %16 = arith.mulf %15, %9 : vector<1x128xf32>
    %17 = arith.addf %5, %16 : vector<1x128xf32>
    %cst_6 = arith.constant 5.000000e-01 : f32
    %18 = vector.broadcast %cst_6 : f32 to vector<1x128xf32>
    %19 = arith.mulf %18, %11 : vector<1x128xf32>
    %20 = arith.subf %7, %19 : vector<1x128xf32>
    %cst_7 = arith.constant 5.000000e-01 : f32
    %21 = vector.broadcast %cst_7 : f32 to vector<1x128xf32>
    %22 = arith.mulf %21, %11 : vector<1x128xf32>
    %23 = arith.addf %7, %22 : vector<1x128xf32>
    %24 = arith.subf %17, %14 : vector<1x128xf32>
    %25 = arith.subf %23, %20 : vector<1x128xf32>
    %26 = arith.mulf %24, %25 : vector<1x128xf32>
    %27 = math.absf %26 : vector<1x128xf32>
    %28 = vector.extract_strided_slice %0 {offsets = [1, 0, 0], sizes = [1, 1, 128], strides = [1, 1, 1]} : vector<10x1x128xf32> to vector<1x1x128xf32>
    %29 = vector.shape_cast %28 : vector<1x1x128xf32> to vector<1x128xf32>
    %30 = vector.extract_strided_slice %0 {offsets = [2, 0, 0], sizes = [1, 1, 128], strides = [1, 1, 1]} : vector<10x1x128xf32> to vector<1x1x128xf32>
    %31 = vector.shape_cast %30 : vector<1x1x128xf32> to vector<1x128xf32>
    %32 = vector.extract_strided_slice %0 {offsets = [3, 0, 0], sizes = [1, 1, 128], strides = [1, 1, 1]} : vector<10x1x128xf32> to vector<1x1x128xf32>
    %33 = vector.shape_cast %32 : vector<1x1x128xf32> to vector<1x128xf32>
    %34 = vector.extract_strided_slice %0 {offsets = [4, 0, 0], sizes = [1, 1, 128], strides = [1, 1, 1]} : vector<10x1x128xf32> to vector<1x1x128xf32>
    %35 = vector.shape_cast %34 : vector<1x1x128xf32> to vector<1x128xf32>
    %cst_8 = arith.constant 5.000000e-01 : f32
    %36 = vector.broadcast %cst_8 : f32 to vector<1x128xf32>
    %37 = arith.mulf %36, %33 : vector<1x128xf32>
    %38 = arith.subf %29, %37 : vector<1x128xf32>
    %cst_9 = arith.constant 5.000000e-01 : f32
    %39 = vector.broadcast %cst_9 : f32 to vector<1x128xf32>
    %40 = arith.mulf %39, %33 : vector<1x128xf32>
    %41 = arith.addf %29, %40 : vector<1x128xf32>
    %cst_10 = arith.constant 5.000000e-01 : f32
    %42 = vector.broadcast %cst_10 : f32 to vector<1x128xf32>
    %43 = arith.mulf %42, %35 : vector<1x128xf32>
    %44 = arith.subf %31, %43 : vector<1x128xf32>
    %cst_11 = arith.constant 5.000000e-01 : f32
    %45 = vector.broadcast %cst_11 : f32 to vector<1x128xf32>
    %46 = arith.mulf %45, %35 : vector<1x128xf32>
    %47 = arith.addf %31, %46 : vector<1x128xf32>
    %48 = arith.minimumf %41, %17 : vector<1x128xf32>
    %49 = arith.maximumf %38, %14 : vector<1x128xf32>
    %50 = arith.subf %48, %49 : vector<1x128xf32>
    %cst_12 = arith.constant 0.000000e+00 : f32
    %51 = vector.broadcast %cst_12 : f32 to vector<1x128xf32>
    %52 = arith.maximumf %50, %51 : vector<1x128xf32>
    %53 = arith.minimumf %47, %23 : vector<1x128xf32>
    %54 = arith.maximumf %44, %20 : vector<1x128xf32>
    %55 = arith.subf %53, %54 : vector<1x128xf32>
    %cst_13 = arith.constant 0.000000e+00 : f32
    %56 = vector.broadcast %cst_13 : f32 to vector<1x128xf32>
    %57 = arith.maximumf %55, %56 : vector<1x128xf32>
    %58 = arith.mulf %52, %57 : vector<1x128xf32>
    %59 = arith.subf %41, %38 : vector<1x128xf32>
    %60 = arith.subf %47, %44 : vector<1x128xf32>
    %61 = arith.mulf %59, %60 : vector<1x128xf32>
    %62 = math.absf %61 : vector<1x128xf32>
    %63 = vector.extract_strided_slice %0 {offsets = [6, 0, 0], sizes = [1, 1, 128], strides = [1, 1, 1]} : vector<10x1x128xf32> to vector<1x1x128xf32>
    %64 = vector.shape_cast %63 : vector<1x1x128xf32> to vector<1x128xf32>
    %65 = vector.extract_strided_slice %0 {offsets = [7, 0, 0], sizes = [1, 1, 128], strides = [1, 1, 1]} : vector<10x1x128xf32> to vector<1x1x128xf32>
    %66 = vector.shape_cast %65 : vector<1x1x128xf32> to vector<1x128xf32>
    %67 = vector.extract_strided_slice %0 {offsets = [8, 0, 0], sizes = [1, 1, 128], strides = [1, 1, 1]} : vector<10x1x128xf32> to vector<1x1x128xf32>
    %68 = vector.shape_cast %67 : vector<1x1x128xf32> to vector<1x128xf32>
    %69 = vector.extract_strided_slice %0 {offsets = [9, 0, 0], sizes = [1, 1, 128], strides = [1, 1, 1]} : vector<10x1x128xf32> to vector<1x1x128xf32>
    %70 = vector.shape_cast %69 : vector<1x1x128xf32> to vector<1x128xf32>
    %cst_14 = arith.constant 5.000000e-01 : f32
    %71 = vector.broadcast %cst_14 : f32 to vector<1x128xf32>
    %72 = arith.mulf %71, %68 : vector<1x128xf32>
    %73 = arith.subf %64, %72 : vector<1x128xf32>
    %cst_15 = arith.constant 5.000000e-01 : f32
    %74 = vector.broadcast %cst_15 : f32 to vector<1x128xf32>
    %75 = arith.mulf %74, %68 : vector<1x128xf32>
    %76 = arith.addf %64, %75 : vector<1x128xf32>
    %cst_16 = arith.constant 5.000000e-01 : f32
    %77 = vector.broadcast %cst_16 : f32 to vector<1x128xf32>
    %78 = arith.mulf %77, %70 : vector<1x128xf32>
    %79 = arith.subf %66, %78 : vector<1x128xf32>
    %cst_17 = arith.constant 5.000000e-01 : f32
    %80 = vector.broadcast %cst_17 : f32 to vector<1x128xf32>
    %81 = arith.mulf %80, %70 : vector<1x128xf32>
    %82 = arith.addf %66, %81 : vector<1x128xf32>
    %83 = arith.minimumf %76, %17 : vector<1x128xf32>
    %84 = arith.maximumf %73, %14 : vector<1x128xf32>
    %85 = arith.subf %83, %84 : vector<1x128xf32>
    %cst_18 = arith.constant 0.000000e+00 : f32
    %86 = vector.broadcast %cst_18 : f32 to vector<1x128xf32>
    %87 = arith.maximumf %85, %86 : vector<1x128xf32>
    %88 = arith.minimumf %82, %23 : vector<1x128xf32>
    %89 = arith.maximumf %79, %20 : vector<1x128xf32>
    %90 = arith.subf %88, %89 : vector<1x128xf32>
    %cst_19 = arith.constant 0.000000e+00 : f32
    %91 = vector.broadcast %cst_19 : f32 to vector<1x128xf32>
    %92 = arith.maximumf %90, %91 : vector<1x128xf32>
    %93 = arith.mulf %87, %92 : vector<1x128xf32>
    %94 = arith.subf %76, %73 : vector<1x128xf32>
    %95 = arith.subf %82, %79 : vector<1x128xf32>
    %96 = arith.mulf %94, %95 : vector<1x128xf32>
    %97 = math.absf %96 : vector<1x128xf32>
    %98 = arith.addf %62, %27 : vector<1x128xf32>
    %99 = arith.subf %98, %58 : vector<1x128xf32>
    %cst_20 = arith.constant 9.99999997E-7 : f32
    %100 = vector.broadcast %cst_20 : f32 to vector<1x128xf32>
    %101 = arith.addf %99, %100 : vector<1x128xf32>
    %102 = arith.addf %97, %27 : vector<1x128xf32>
    %103 = arith.subf %102, %93 : vector<1x128xf32>
    %cst_21 = arith.constant 9.99999997E-7 : f32
    %104 = vector.broadcast %cst_21 : f32 to vector<1x128xf32>
    %105 = arith.addf %103, %104 : vector<1x128xf32>
    %106 = arith.mulf %93, %101 : vector<1x128xf32>
    %107 = arith.mulf %58, %105 : vector<1x128xf32>
    %108 = arith.cmpf ogt, %106, %107 : vector<1x128xf32>
    %109 = arith.extui %108 : vector<1x128xi1> to vector<1x128xi32>
    %110 = arith.sitofp %109 : vector<1x128xi32> to vector<1x128xf32>
    %cst_22 = arith.constant 1.000000e+00 : f32
    %111 = vector.broadcast %cst_22 : f32 to vector<1x128xf32>
    %112 = arith.subf %111, %110 : vector<1x128xf32>
    %113 = vector.shape_cast %3 : vector<1x128xf32> to vector<1x1x128xf32>
    %114 = vector.shape_cast %110 : vector<1x128xf32> to vector<1x1x128xf32>
    %115 = vector.extract_strided_slice %0 {offsets = [6, 0, 0], sizes = [4, 1, 128], strides = [1, 1, 1]} : vector<10x1x128xf32> to vector<4x1x128xf32>
    %116 = vector.broadcast %114 : vector<1x1x128xf32> to vector<4x1x128xf32>
    %117 = arith.mulf %116, %115 : vector<4x1x128xf32>
    %118 = vector.shape_cast %112 : vector<1x128xf32> to vector<1x1x128xf32>
    %119 = vector.extract_strided_slice %0 {offsets = [1, 0, 0], sizes = [4, 1, 128], strides = [1, 1, 1]} : vector<10x1x128xf32> to vector<4x1x128xf32>
    %120 = vector.broadcast %118 : vector<1x1x128xf32> to vector<4x1x128xf32>
    %121 = arith.mulf %120, %119 : vector<4x1x128xf32>
    %122 = arith.addf %117, %121 : vector<4x1x128xf32>
    %123 = vector.broadcast %113 : vector<1x1x128xf32> to vector<4x1x128xf32>
    %124 = arith.mulf %123, %122 : vector<4x1x128xf32>
    %125 = vector.extract_strided_slice %1 {offsets = [1, 0, 0], sizes = [4, 1, 128], strides = [1, 1, 1]} : vector<5x1x128xf32> to vector<4x1x128xf32>
    %126 = vector.broadcast %113 : vector<1x1x128xf32> to vector<4x1x128xf32>
    %127 = arith.mulf %126, %125 : vector<4x1x128xf32>
    %128 = arith.subf %124, %127 : vector<4x1x128xf32>
    %129 = arith.mulf %128, %128 : vector<4x1x128xf32>
    %130 = vector.extract_strided_slice %129 {offsets = [0, 0, 0], sizes = [1, 1, 128], strides = [1, 1, 1]} : vector<4x1x128xf32> to vector<1x1x128xf32>
    %131 = vector.shape_cast %130 : vector<1x1x128xf32> to vector<1x128xf32>
    %132 = vector.extract_strided_slice %129 {offsets = [1, 0, 0], sizes = [1, 1, 128], strides = [1, 1, 1]} : vector<4x1x128xf32> to vector<1x1x128xf32>
    %133 = vector.shape_cast %132 : vector<1x1x128xf32> to vector<1x128xf32>
    %134 = arith.addf %131, %133 : vector<1x128xf32>
    %135 = vector.extract_strided_slice %129 {offsets = [2, 0, 0], sizes = [1, 1, 128], strides = [1, 1, 1]} : vector<4x1x128xf32> to vector<1x1x128xf32>
    %136 = vector.shape_cast %135 : vector<1x1x128xf32> to vector<1x128xf32>
    %137 = arith.addf %134, %136 : vector<1x128xf32>
    %138 = vector.extract_strided_slice %129 {offsets = [3, 0, 0], sizes = [1, 1, 128], strides = [1, 1, 1]} : vector<4x1x128xf32> to vector<1x1x128xf32>
    %139 = vector.shape_cast %138 : vector<1x1x128xf32> to vector<1x128xf32>
    %140 = arith.addf %137, %139 : vector<1x128xf32>
    %141 = vector.extract_strided_slice %0 {offsets = [5, 0, 0], sizes = [1, 1, 128], strides = [1, 1, 1]} : vector<10x1x128xf32> to vector<1x1x128xf32>
    %142 = vector.shape_cast %141 : vector<1x1x128xf32> to vector<1x128xf32>
    %143 = arith.mulf %110, %142 : vector<1x128xf32>
    %144 = vector.extract_strided_slice %0 {offsets = [0, 0, 0], sizes = [1, 1, 128], strides = [1, 1, 1]} : vector<10x1x128xf32> to vector<1x1x128xf32>
    %145 = vector.shape_cast %144 : vector<1x1x128xf32> to vector<1x128xf32>
    %146 = arith.mulf %112, %145 : vector<1x128xf32>
    %147 = arith.addf %143, %146 : vector<1x128xf32>
    %148 = arith.subf %147, %3 : vector<1x128xf32>
    %149 = arith.mulf %3, %148 : vector<1x128xf32>
    %150 = arith.mulf %149, %149 : vector<1x128xf32>
    %cst_23 = arith.constant dense<0.000000e+00> : vector<128xf32>
    %151 = vector.multi_reduction <add>, %140, %cst_23 [0] : vector<1x128xf32> to vector<128xf32>
    %152 = vector.shape_cast %151 : vector<128xf32> to vector<1x128xf32>
    %c0_24 = arith.constant 0 : index
    %c0_25 = arith.constant 0 : index
    %153 = vector.load %arg3[%c0_24, %c0_25] : memref<2x128xf32, #tpu.memory_space<vmem>>, vector<1x128xf32>
    tpu.vector_store %arg3[%c0_24, %c0_25], %152 {strides = array<i32>} : memref<2x128xf32, #tpu.memory_space<vmem>>, vector<1x128xf32>,
    %cst_26 = arith.constant dense<0.000000e+00> : vector<128xf32>
    %154 = vector.multi_reduction <add>, %150, %cst_26 [0] : vector<1x128xf32> to vector<128xf32>
    %155 = vector.shape_cast %154 : vector<128xf32> to vector<1x128xf32>
    %c1 = arith.constant 1 : index
    %c0_27 = arith.constant 0 : index
    %156 = vector.load %arg3[%c1, %c0_27] : memref<2x128xf32, #tpu.memory_space<vmem>>, vector<1x128xf32>
    tpu.vector_store %arg3[%c1, %c0_27], %155 {strides = array<i32>} : memref<2x128xf32, #tpu.memory_space<vmem>>, vector<1x128xf32>,
    %c0_28 = arith.constant 0 : index
    %c0_29 = arith.constant 0 : index
    %c0_30 = arith.constant 0 : index
    %157 = vector.load %arg4[%c0_28, %c0_29, %c0_30] : memref<4x1x128xf32, #tpu.memory_space<vmem>>, vector<4x1x128xf32>
    tpu.vector_store %arg4[%c0_28, %c0_29, %c0_30], %124 {strides = array<i32>} : memref<4x1x128xf32, #tpu.memory_space<vmem>>, vector<4x1x128xf32>,
    return
  }
  func.func @transform_0(%arg0: i32) -> (i32, i32, i32) {
    %c0_i32 = arith.constant 0 : i32
    %c0_i32_0 = arith.constant 0 : i32
    %c0_i32_1 = arith.constant 0 : i32
    return %c0_i32, %arg0, %c0_i32_0 : i32, i32, i32
  }
  func.func @transform_1(%arg0: i32) -> (i32, i32, i32) {
    %c0_i32 = arith.constant 0 : i32
    %c0_i32_0 = arith.constant 0 : i32
    %c0_i32_1 = arith.constant 0 : i32
    return %c0_i32, %arg0, %c0_i32_0 : i32, i32, i32
  }
  func.func @transform_2(%arg0: i32) -> (i32, i32) {
    %c0_i32 = arith.constant 0 : i32
    %c0_i32_0 = arith.constant 0 : i32
    return %c0_i32, %arg0 : i32, i32
  }
  func.func @transform_3(%arg0: i32) -> (i32, i32, i32) {
    %c0_i32 = arith.constant 0 : i32
    %c0_i32_0 = arith.constant 0 : i32
    %c0_i32_1 = arith.constant 0 : i32
    return %c0_i32, %arg0, %c0_i32_0 : i32, i32, i32
  }
}

</mosaic_0001>

<llo_original>
// kernel: yolo_loss.1
$region0: #{yolo_loss.1}
  #allocation0 [shape = 'u32[]', space=smem, size = 0x4, offset = 0x4, fixed_abs, tag = 'smem constant byte address 0x4 - core index']
  #allocation1 [shape = 'u32[144,128]{1,0:T(1,128)}', space=vmem, size = 0x12000, scoped, tag = 'internal scratch']
  %s0 = inlined_call_operand.vmem [shape: f32[10,1,128], index: 0, kind: input, shape index: {}]
  %s1 = inlined_call_operand.vmem [shape: f32[5,1,128], index: 1, kind: input, shape index: {}]
  %s2 = inlined_call_operand.vmem [shape: f32[2,128], index: 2, kind: output, shape index: {0}]
  %s3 = inlined_call_operand.vmem [shape: f32[4,1,128], index: 3, kind: output, shape index: {1}]
  %4 = xla_tuple %s2, %s3
  %s5 = sld [smem:[#allocation0]]
  $region26: #{yolo_loss.1} parent=0
    _
  %s7 = ssub.s32 1, %s5
  %s8 = scalar_select 0, %s7, %s5
  // Predicated region
  $region2: #{yolo_loss.1} parent=0 // pred_check
    _
  $region3: #{yolo_loss.1} parent=0 // pred_check_branch
    %10 = sbr.rel (0) target = $region5
  $region4: #{yolo_loss.1} parent=0 // pred_region
    _
  $region5: #{yolo_loss.1} parent=0 // pred_fallthru
    _
  // Predicated region
  $region6: #{yolo_loss.1} parent=0 // pred_check
    _
  $region7: #{yolo_loss.1} parent=0 // pred_check_branch
    %12 = sbr.rel (0) target = $region9
  $region8: #{yolo_loss.1} parent=0 // pred_region
    _
  $region9: #{yolo_loss.1} parent=0 // pred_fallthru
    _
  %v13 = vld [vmem:[%s0] sm:$0x1]
  %v14 = vld [vmem:[%s0 + $0x1] sm:$0x1]
  %v15 = vld [vmem:[%s0 + $0x2] sm:$0x1]
  %v16 = vld [vmem:[%s0 + $0x3] sm:$0x1]
  %v17 = vld [vmem:[%s0 + $0x4] sm:$0x1]
  %v18 = vld [vmem:[%s0 + $0x5] sm:$0x1]
  %v19 = vld [vmem:[%s0 + $0x6] sm:$0x1]
  %v20 = vld [vmem:[%s0 + $0x7] sm:$0x1]
  %v21 = vld [vmem:[%s0 + $0x8] sm:$0x1]
  %v22 = vld [vmem:[%s0 + $0x9] sm:$0x1]
  %v23 = vld [vmem:[%s1] sm:$0x1]
  %v24 = vld [vmem:[%s1 + $0x1] sm:$0x1]
  %v25 = vld [vmem:[%s1 + $0x2] sm:$0x1]
  %v26 = vld [vmem:[%s1 + $0x3] sm:$0x1]
  %v27 = vld [vmem:[%s1 + $0x4] sm:$0x1]
  %v28 = vmul.f32 %v26, 0.5
  %v29 = vsub.f32 %v24, %v28
  %v30 = vadd.f32 %v24, %v28
  %v31 = vmul.f32 %v27, 0.5
  %v32 = vsub.f32 %v25, %v31
  %v33 = vadd.f32 %v25, %v31
  %v34 = vsub.f32 %v30, %v29
  %v35 = vsub.f32 %v33, %v32
  %v36 = vmul.f32 %v34, %v35
  %v37 = vand.u32 2147483647, %v36
  %v38 = vmul.f32 %v16, 0.5
  %v39 = vsub.f32 %v14, %v38
  %v40 = vadd.f32 %v14, %v38
  %v41 = vmul.f32 %v17, 0.5
  %v42 = vsub.f32 %v15, %v41
  %v43 = vadd.f32 %v15, %v41
  %v44 = vmin.f32 %v40, %v30
  %v45 = vmax.f32 %v39, %v29
  %v46 = vsub.f32 %v44, %v45
  %v47 = vmax.f32 %v46, 0.0
  %v48 = vmin.f32 %v43, %v33
  %v49 = vmax.f32 %v42, %v32
  %v50 = vsub.f32 %v48, %v49
  %v51 = vmax.f32 %v50, 0.0
  %v52 = vmul.f32 %v47, %v51
  %v53 = vsub.f32 %v40, %v39
  %v54 = vsub.f32 %v43, %v42
  %v55 = vmul.f32 %v53, %v54
  %v56 = vand.u32 2147483647, %v55
  %v57 = vmul.f32 %v21, 0.5
  %v58 = vsub.f32 %v19, %v57
  %v59 = vadd.f32 %v19, %v57
  %v60 = vmul.f32 %v22, 0.5
  %v61 = vsub.f32 %v20, %v60
  %v62 = vadd.f32 %v20, %v60
  %v63 = vmin.f32 %v59, %v30
  %v64 = vmax.f32 %v58, %v29
  %v65 = vsub.f32 %v63, %v64
  %v66 = vmax.f32 %v65, 0.0
  %v67 = vmin.f32 %v62, %v33
  %v68 = vmax.f32 %v61, %v32
  %v69 = vsub.f32 %v67, %v68
  %v70 = vmax.f32 %v69, 0.0
  %v71 = vmul.f32 %v66, %v70
  %v72 = vsub.f32 %v59, %v58
  %v73 = vsub.f32 %v62, %v61
  %v74 = vmul.f32 %v72, %v73
  %v75 = vand.u32 2147483647, %v74
  %v76 = vadd.f32 %v56, %v37
  %v77 = vsub.f32 %v76, %v52
  %v78 = vadd.f32 %v77, 1e-06
  %v79 = vadd.f32 %v75, %v37
  %v80 = vsub.f32 %v79, %v71
  %v81 = vadd.f32 %v80, 1e-06
  %v82 = vmul.f32 %v71, %v78
  %v83 = vmul.f32 %v52, %v81
  %vm84 = vcmp.gt.f32.partialorder %v82, %v83
  %v85 = vsel %vm84, 1, 0
  %v86 = vcvt.s32.f32 %v85
  %v87 = vsub.f32 1.0, %v86
  %v88 = vmul.f32 %v86, %v19
  %v89 = vmul.f32 %v86, %v20
  %v90 = vmul.f32 %v86, %v21
  %v91 = vmul.f32 %v86, %v22
  %v92 = vmul.f32 %v87, %v14
  %v93 = vmul.f32 %v87, %v15
  %v94 = vmul.f32 %v87, %v16
  %v95 = vmul.f32 %v87, %v17
  %v96 = vadd.f32 %v88, %v92
  %v97 = vadd.f32 %v89, %v93
  %v98 = vadd.f32 %v90, %v94
  %v99 = vadd.f32 %v91, %v95
  %v100 = vmul.f32 %v23, %v96
  %v101 = vmul.f32 %v23, %v97
  %v102 = vmul.f32 %v23, %v98
  %v103 = vmul.f32 %v23, %v99
  %v104 = vmul.f32 %v23, %v24
  %v105 = vmul.f32 %v23, %v25
  %v106 = vmul.f32 %v23, %v26
  %v107 = vmul.f32 %v23, %v27
  %v108 = vsub.f32 %v100, %v104
  %v109 = vsub.f32 %v101, %v105
  %v110 = vsub.f32 %v102, %v106
  %v111 = vsub.f32 %v103, %v107
  %v112 = vmul.f32 %v108, %v108
  %v113 = vmul.f32 %v109, %v109
  %v114 = vmul.f32 %v110, %v110
  %v115 = vmul.f32 %v111, %v111
  %v116 = vadd.f32 %v112, %v113
  %v117 = vadd.f32 %v116, %v114
  %v118 = vadd.f32 %v117, %v115
  %v119 = vmul.f32 %v86, %v18
  %v120 = vmul.f32 %v87, %v13
  %v121 = vadd.f32 %v119, %v120
  %v122 = vsub.f32 %v121, %v23
  %v123 = vmul.f32 %v23, %v122
  %v124 = vmul.f32 %v123, %v123
  %v125 = vadd.f32 %v118, 0.0
  %126 = vst [vmem:[%s2] sm:$0x1] %v125
  %v127 = vadd.f32 %v124, 0.0
  %128 = vst [vmem:[%s2 + $0x1] sm:$0x1] %v127
  %129 = vst [vmem:[%s3] sm:$0x1] %v100
  %130 = vst [vmem:[%s3 + $0x1] sm:$0x1] %v101
  %131 = vst [vmem:[%s3 + $0x2] sm:$0x1] %v102
  %132 = vst [vmem:[%s3 + $0x3] sm:$0x1] %v103
  // Predicated region
  $region10: #{yolo_loss.1} parent=0 // pred_check
    _
  $region11: #{yolo_loss.1} parent=0 // pred_check_branch
    %134 = sbr.rel (0) target = $region13
  $region12: #{yolo_loss.1} parent=0 // pred_region
    _
  $region13: #{yolo_loss.1} parent=0 // pred_fallthru
    _
  // Predicated region
  $region14: #{yolo_loss.1} parent=0 // pred_check
    _
  $region15: #{yolo_loss.1} parent=0 // pred_check_branch
    %136 = sbr.rel (0) target = $region17
  $region16: #{yolo_loss.1} parent=0 // pred_region
    _
  $region17: #{yolo_loss.1} parent=0 // pred_fallthru
    _
  // Predicated region
  $region18: #{yolo_loss.1} parent=0 // pred_check
    _
  $region19: #{yolo_loss.1} parent=0 // pred_check_branch
    %138 = sbr.rel (0) target = $region21
  $region20: #{yolo_loss.1} parent=0 // pred_region
    _
  $region21: #{yolo_loss.1} parent=0 // pred_fallthru
    _
  // Predicated region
  $region22: #{yolo_loss.1} parent=0 // pred_check
    _
  $region23: #{yolo_loss.1} parent=0 // pred_check_branch
    %140 = sbr.rel (0) target = $region25
  $region24: #{yolo_loss.1} parent=0 // pred_region
    _
  $region25: #{yolo_loss.1} parent=0 // pred_fallthru
    _

</llo_original>
